<compile_context>
chip_gen: v5e
topology: v5e:2x2
jax: 0.10.0
libtpu: 0.0.40
codegen_flags: <defaults>
</compile_context>

<pallas_src>
import functools

import jax
import jax.numpy as jnp
from jax import lax
from jax.experimental import pallas as pl
from jax.experimental.pallas import tpu as pltpu


def _round_up(x, m):
    return -(-x // m) * m


def _vmem_need(tb, tc, d, itemsize):
    """Conservative VMEM estimate for one (TB, TC) configuration."""
    inputs = 2 * (tb * d + tc * d) * itemsize   # double-buffered q tile + negatives tile
    rowio = 2 * 2 * tb * 4                      # (TB,1) sim_pos input + (TB,1) loss output
    scratch = 2 * tb * 4                        # m, s online-logsumexp state
    interm = 2 * tb * tc * 4                    # f32 sim / exp temporaries
    return inputs + rowio + scratch + interm


def _choose_tiles(b, c, d, itemsize, budget):
    """Pick (TB, TC).  Priority 1: maximise TB (arithmetic intensity on the
    negatives stream; whole-batch-resident TB means negatives are read from
    HBM exactly once).  Priority 2: TC as large as possible (multiple of 128).
    Everything constrained by the VMEM budget."""
    sub = {1: 32, 2: 16}.get(itemsize, 8)       # sublane multiple for the dtype
    b_full = _round_up(b, sub)

    tb_opts = []
    if b_full <= 1024:
        tb_opts.append(b_full)                  # whole (padded) batch resident
    tb_opts += [t for t in (1024, 896, 768, 640, 512, 384, 256, 128) if t < b_full]
    tb_opts += [t for t in (64, 32, 16, 8) if t % sub == 0 and t < b_full]

    c_cap = _round_up(c, 128)
    tc_opts = [t for t in (512, 256, 128) if t <= c_cap] or [128]

    for tb in tb_opts:
        for tc in tc_opts:
            if _vmem_need(tb, tc, d, itemsize) <= budget:
                return tb, tc
    return tb_opts[-1], 128                     # pathological D; vmem_limit raised below


def _infonce_kernel(pos_ref, q_ref, n_ref, out_ref, m_ref, s_ref, *,
                    inv_t, tc, n_chunks, c_valid, mask_cols):
    """One (TB, TC) step of the flash-style online logsumexp over negatives."""
    ci = pl.program_id(1)

    @pl.when(ci == 0)
    def _init():
        pos = pos_ref[...]                      # (TB, 1) f32, already scaled by 1/T
        m_ref[...] = pos                        # seed running max with the positive logit
        s_ref[...] = jnp.ones_like(pos)         # exp(pos - pos) == 1

    q = q_ref[...]                              # (TB, D), native/compute dtype
    ck = tc // n_chunks
    for k in range(n_chunks):                   # unrolled: dot(k+1) overlaps LSE-update(k)
        nk = n_ref[k * ck:(k + 1) * ck, :]      # (CK, D) static slice of the streamed tile
        # 'bd,cd->bc': contract the shared embedding dim -> transposed-RHS MXU
        # path (no vxpose of the negatives tile); accumulate in f32.
        sim = lax.dot_general(q, nk,
                              dimension_numbers=(((1,), (1,)), ((), ())),
                              preferred_element_type=jnp.float32)
        sim = sim * jnp.float32(inv_t)          # scale f32 logits after the dot (PyTorch order)
        if mask_cols:                           # traced only when C was padded
            col = ci * tc + k * ck + lax.broadcasted_iota(jnp.int32, (1, ck), 1)
            sim = jnp.where(col < c_valid, sim, jnp.float32(-1e30))

        # Online logsumexp update of the (TB, 1) running state.
        m_prev = m_ref[...]
        m_new = jnp.maximum(m_prev, jnp.max(sim, axis=-1, keepdims=True))
        alpha = jnp.exp(m_prev - m_new)
        s_ref[...] = alpha * s_ref[...] + jnp.sum(jnp.exp(sim - m_new),
                                                  axis=-1, keepdims=True)
        m_ref[...] = m_new

    @pl.when(ci == pl.num_programs(1) - 1)
    def _finalize():
        lse = m_ref[...] + jnp.log(s_ref[...])  # (TB, 1)
        # Cross entropy with label 0 (the positive) for every row.
        out_ref[...] = (lse - pos_ref[...]).astype(out_ref.dtype)


def infonce_loss(query_embeddings, pos_embeddings, neg_embeddings,
                 temperature=0.07, *, compute_dtype=None, tb=None, tc=None,
                 vmem_budget_bytes=40 * 2**20):
    """Pallas implementation of InfoNCELoss.forward.  Returns a scalar f32.

    compute_dtype: MXU operand dtype.  The MXU is bf16-native on v5e/v6e/v7x;
    pass jnp.bfloat16 (or feed bf16 inputs) for peak throughput.  f32 inputs
    default to the exact-parity f32 path.
    """
    B, D = query_embeddings.shape
    C, D2 = neg_embeddings.shape
    assert pos_embeddings.shape == (B, D) and D2 == D

    inv_t = 1.0 / float(temperature)

    # Positive-pair logits: O(B*D) work, done once in f32 outside the kernel so
    # the p stream (and its double-buffered (TB, D) VMEM) never enters the kernel.
    sim_pos = jnp.einsum("bd,bd->b",
                         query_embeddings.astype(jnp.float32),
                         pos_embeddings.astype(jnp.float32)) * jnp.float32(inv_t)

    cdt = (jnp.dtype(compute_dtype) if compute_dtype is not None
           else jnp.dtype(query_embeddings.dtype))
    q = query_embeddings.astype(cdt)
    n = neg_embeddings.astype(cdt)
    isz = cdt.itemsize
    sub = {1: 32, 2: 16}.get(isz, 8)

    auto_tb, auto_tc = _choose_tiles(B, C, D, isz, vmem_budget_bytes)
    TB = auto_tb if tb is None else _round_up(min(tb, _round_up(B, sub)), sub)
    TC = auto_tc if tc is None else max(128, _round_up(tc, 128))

    B_pad = _round_up(B, TB)
    C_pad = _round_up(C, TC)
    nb, nc = B_pad // TB, C_pad // TC

    if B_pad != B:                                # padded rows are sliced out before the mean
        q = jnp.pad(q, ((0, B_pad - B), (0, 0)))
        sim_pos = jnp.pad(sim_pos, (0, B_pad - B))
    if C_pad != C:                                # padded columns are masked in-kernel
        n = jnp.pad(n, ((0, C_pad - C), (0, 0)))
    sim_pos = sim_pos.reshape(B_pad, 1)

    n_chunks = 2 if TC % 256 == 0 else 1
    kernel = functools.partial(_infonce_kernel, inv_t=inv_t, tc=TC,
                               n_chunks=n_chunks, c_valid=C,
                               mask_cols=(C_pad != C))

    need = _vmem_need(TB, TC, D, isz)
    vmem_limit = int(min(max(need + 16 * 2**20, 32 * 2**20), 64 * 2**20))

    cost = pl.CostEstimate(
        flops=int(2 * B_pad * C_pad * D),
        transcendentals=int(B_pad * C_pad + B_pad * (nc + 1)),
        bytes_accessed=int(B_pad * D * isz + nb * C_pad * D * isz + 2 * B_pad * 4),
    )

    per_row = pl.pallas_call(
        kernel,
        out_shape=jax.ShapeDtypeStruct((B_pad, 1), jnp.float32),
        grid_spec=pltpu.PrefetchScalarGridSpec(
            num_scalar_prefetch=0,
            grid=(nb, nc),                                       # (B tiles, C tiles)
            in_specs=[
                pl.BlockSpec((TB, 1), lambda bi, ci: (bi, 0)),   # sim_pos: resident per B tile
                pl.BlockSpec((TB, D), lambda bi, ci: (bi, 0)),   # q:       resident per B tile
                pl.BlockSpec((TC, D), lambda bi, ci: (ci, 0)),   # negatives: streamed over C
            ],
            out_specs=pl.BlockSpec((TB, 1), lambda bi, ci: (bi, 0)),
            scratch_shapes=[
                pltpu.VMEM((TB, 1), jnp.float32),   # running max m
                pltpu.VMEM((TB, 1), jnp.float32),   # running sum s
            ],
        ),
        compiler_params=pltpu.CompilerParams(
            dimension_semantics=("parallel", "arbitrary"),
            vmem_limit_bytes=vmem_limit,
        ),
        cost_estimate=cost,
    )(sim_pos, q, n)

    # Mean cross-entropy over the real (unpadded) rows.
    return jnp.mean(per_row.reshape(B_pad)[:B])


def _infonce_ref(q, p, n, temperature):
    """Pure-JAX reference mirroring the PyTorch module."""
    inv_t = 1.0 / float(temperature)
    q = q.astype(jnp.float32)
    p = p.astype(jnp.float32)
    n = n.astype(jnp.float32)
    sim_pos = jnp.einsum("bd,bd->b", q, p) * inv_t
    sim_neg = jnp.einsum("bd,cd->bc", q, n) * inv_t
    logits = jnp.concatenate([sim_pos[:, None], sim_neg], axis=1)
    lse = jax.nn.logsumexp(logits, axis=1)
    return jnp.mean(lse - logits[:, 0])


if __name__ == "__main__":
    temperature = 0.07
    key = jax.random.PRNGKey(0)
    kq, kp, kn = jax.random.split(key, 3)

    # Case 1: small aligned shapes, auto tiling (whole batch resident; the
    # padded negatives tail is masked in-kernel; two C sub-chunks per step).
    B, D, C = 16, 64, 384
    q = jax.random.normal(kq, (B, D), dtype=jnp.float32)
    p = jax.random.normal(kp, (B, D), dtype=jnp.float32)
    n = jax.random.normal(kn, (C, D), dtype=jnp.float32)
    ref = _infonce_ref(q, p, n, temperature)
    out = jax.block_until_ready(infonce_loss(q, p, n, temperature))
    assert jnp.allclose(out, ref, rtol=1e-4, atol=1e-4), (out, ref)

    # Case 2: forced TC=128 -> 3-step online logsumexp, no padding, no chunking.
    out2 = jax.block_until_ready(infonce_loss(q, p, n, temperature, tc=128))
    assert jnp.allclose(out2, ref, rtol=1e-4, atol=1e-4), (out2, ref)

    # Case 3: ragged B and C (B padding + masked last negatives tile).
    B3, C3 = 13, 300
    q3 = jax.random.normal(kq, (B3, D), dtype=jnp.float32)
    p3 = jax.random.normal(kp, (B3, D), dtype=jnp.float32)
    n3 = jax.random.normal(kn, (C3, D), dtype=jnp.float32)
    ref3 = _infonce_ref(q3, p3, n3, temperature)
    out3 = jax.block_until_ready(infonce_loss(q3, p3, n3, temperature))
    assert jnp.allclose(out3, ref3, rtol=1e-4, atol=1e-4), (out3, ref3)

    # Case 4: bf16 operands (native MXU dtype on all three generations).
    qb, pb, nb_ = (x.astype(jnp.bfloat16) for x in (q, p, n))
    refb = _infonce_ref(qb, pb, nb_, temperature)
    outb = jax.block_until_ready(infonce_loss(qb, pb, nb_, temperature))
    assert jnp.allclose(outb, refb, rtol=2e-3, atol=2e-3), (outb, refb)

    print("KERNEL_OK")
</pallas_src>

<mosaic_0001>
module attributes {stable_mosaic.version = 11 : i64} {
  func.func @_infonce_kernel(%arg0: i32, %arg1: i32, %arg2: memref<16x1xf32, #tpu.memory_space<vmem>>, %arg3: memref<16x64xf32, #tpu.memory_space<vmem>>, %arg4: memref<256x64xf32, #tpu.memory_space<vmem>>, %arg5: memref<16x1xf32, #tpu.memory_space<vmem>>, %arg6: memref<16x1xf32, #tpu.memory_space<vmem>>, %arg7: memref<16x1xf32, #tpu.memory_space<vmem>>) attributes {dimension_semantics = [#tpu.dimension_semantics<parallel>, #tpu.dimension_semantics<arbitrary>], iteration_bounds = array<i64: 1, 2>, scalar_prefetch = 0 : i64, scratch_operands = 2 : i64, tpu.core_type = #tpu.core_type<tc>, window_params = [{transform_indices = @transform_0, window_bounds = array<i64: 16, 1>}, {transform_indices = @transform_1, window_bounds = array<i64: 16, 64>}, {transform_indices = @transform_2, window_bounds = array<i64: 256, 64>}, {transform_indices = @transform_3, window_bounds = array<i64: 16, 1>}]} {
    %c0_i32 = arith.constant 0 : i32
    %0 = arith.cmpi eq, %arg1, %c0_i32 : i32
    %1 = arith.extui %0 : i1 to i32
    %c0_i32_0 = arith.constant 0 : i32
    %2 = arith.cmpi ne, %1, %c0_i32_0 : i32
    scf.if %2 {
      %c0_34 = arith.constant 0 : index
      %c0_35 = arith.constant 0 : index
      %69 = vector.load %arg2[%c0_34, %c0_35] : memref<16x1xf32, #tpu.memory_space<vmem>>, vector<16x1xf32>
      %c0_36 = arith.constant 0 : index
      %c0_37 = arith.constant 0 : index
      %70 = vector.load %arg6[%c0_36, %c0_37] : memref<16x1xf32, #tpu.memory_space<vmem>>, vector<16x1xf32>
      tpu.vector_store %arg6[%c0_36, %c0_37], %69 {strides = array<i32>} : memref<16x1xf32, #tpu.memory_space<vmem>>, vector<16x1xf32>,
      %cst_38 = arith.constant 1.000000e+00 : f32
      %71 = vector.broadcast %cst_38 : f32 to vector<16x1xf32>
      %c0_39 = arith.constant 0 : index
      %c0_40 = arith.constant 0 : index
      %72 = vector.load %arg7[%c0_39, %c0_40] : memref<16x1xf32, #tpu.memory_space<vmem>>, vector<16x1xf32>
      tpu.vector_store %arg7[%c0_39, %c0_40], %71 {strides = array<i32>} : memref<16x1xf32, #tpu.memory_space<vmem>>, vector<16x1xf32>,
    } else {
    }
    %c0 = arith.constant 0 : index
    %c0_1 = arith.constant 0 : index
    %3 = vector.load %arg3[%c0, %c0_1] : memref<16x64xf32, #tpu.memory_space<vmem>>, vector<16x64xf32>
    %c0_2 = arith.constant 0 : index
    %c0_3 = arith.constant 0 : index
    %4 = vector.load %arg4[%c0_2, %c0_3] : memref<256x64xf32, #tpu.memory_space<vmem>>, vector<128x64xf32>
    %cst = arith.constant dense<0.000000e+00> : vector<16x128xf32>
    %5 = tpu.matmul %3, %4, %cst {dimension_numbers = #tpu.dot_dimension_numbers<[1], [1], [0], [0], [0, 0, 1, 0], [], []>} : vector<16x64xf32>, vector<128x64xf32>, vector<16x128xf32> -> vector<16x128xf32>
    %cst_4 = arith.constant 14.2857141 : f32
    %6 = vector.broadcast %cst_4 : f32 to vector<16x128xf32>
    %7 = arith.mulf %5, %6 : vector<16x128xf32>
    %c256_i32 = arith.constant 256 : i32
    %8 = arith.muli %arg1, %c256_i32 : i32
    %c0_i32_5 = arith.constant 0 : i32
    %9 = arith.addi %8, %c0_i32_5 : i32
    %10 = tpu.iota {dimensions = array<i32: 1>} : vector<1x128xi32>
    %11 = vector.broadcast %9 : i32 to vector<1x128xi32>
    %12 = arith.addi %11, %10 : vector<1x128xi32>
    %c384_i32 = arith.constant 384 : i32
    %13 = vector.broadcast %c384_i32 : i32 to vector<1x128xi32>
    %14 = arith.cmpi slt, %12, %13 : vector<1x128xi32>
    %cst_6 = arith.constant -1.000000e+30 : f32
    %15 = vector.shape_cast %14 : vector<1x128xi1> to vector<1x128xi1>
    %16 = vector.broadcast %15 : vector<1x128xi1> to vector<16x128xi1>
    %17 = vector.broadcast %cst_6 : f32 to vector<16x128xf32>
    %18 = arith.select %16, %7, %17 : vector<16x128xi1>, vector<16x128xf32>
    %c0_7 = arith.constant 0 : index
    %c0_8 = arith.constant 0 : index
    %19 = vector.load %arg6[%c0_7, %c0_8] : memref<16x1xf32, #tpu.memory_space<vmem>>, vector<16x1xf32>
    %cst_9 = arith.constant dense<0xFF800000> : vector<16xf32>
    %20 = vector.multi_reduction <maximumf>, %18, %cst_9 [1] : vector<16x128xf32> to vector<16xf32>
    %21 = vector.shape_cast %20 : vector<16xf32> to vector<16x1xf32>
    %22 = arith.maximumf %19, %21 : vector<16x1xf32>
    %23 = arith.subf %19, %22 : vector<16x1xf32>
    %24 = math.exp %23 : vector<16x1xf32>
    %c0_10 = arith.constant 0 : index
    %c0_11 = arith.constant 0 : index
    %25 = vector.load %arg7[%c0_10, %c0_11] : memref<16x1xf32, #tpu.memory_space<vmem>>, vector<16x1xf32>
    %26 = arith.mulf %24, %25 : vector<16x1xf32>
    %27 = vector.broadcast %22 : vector<16x1xf32> to vector<16x128xf32>
    %28 = arith.subf %18, %27 : vector<16x128xf32>
    %29 = math.exp %28 : vector<16x128xf32>
    %cst_12 = arith.constant dense<0.000000e+00> : vector<16xf32>
    %30 = vector.multi_reduction <add>, %29, %cst_12 [1] : vector<16x128xf32> to vector<16xf32>
    %31 = vector.shape_cast %30 : vector<16xf32> to vector<16x1xf32>
    %32 = arith.addf %26, %31 : vector<16x1xf32>
    %c0_13 = arith.constant 0 : index
    %c0_14 = arith.constant 0 : index
    %33 = vector.load %arg7[%c0_13, %c0_14] : memref<16x1xf32, #tpu.memory_space<vmem>>, vector<16x1xf32>
    tpu.vector_store %arg7[%c0_13, %c0_14], %32 {strides = array<i32>} : memref<16x1xf32, #tpu.memory_space<vmem>>, vector<16x1xf32>,
    %c0_15 = arith.constant 0 : index
    %c0_16 = arith.constant 0 : index
    %34 = vector.load %arg6[%c0_15, %c0_16] : memref<16x1xf32, #tpu.memory_space<vmem>>, vector<16x1xf32>
    tpu.vector_store %arg6[%c0_15, %c0_16], %22 {strides = array<i32>} : memref<16x1xf32, #tpu.memory_space<vmem>>, vector<16x1xf32>,
    %c128 = arith.constant 128 : index
    %c0_17 = arith.constant 0 : index
    %35 = vector.load %arg4[%c128, %c0_17] : memref<256x64xf32, #tpu.memory_space<vmem>>, vector<128x64xf32>
    %cst_18 = arith.constant dense<0.000000e+00> : vector<16x128xf32>
    %36 = tpu.matmul %3, %35, %cst_18 {dimension_numbers = #tpu.dot_dimension_numbers<[1], [1], [0], [0], [0, 0, 1, 0], [], []>} : vector<16x64xf32>, vector<128x64xf32>, vector<16x128xf32> -> vector<16x128xf32>
    %cst_19 = arith.constant 14.2857141 : f32
    %37 = vector.broadcast %cst_19 : f32 to vector<16x128xf32>
    %38 = arith.mulf %36, %37 : vector<16x128xf32>
    %c256_i32_20 = arith.constant 256 : i32
    %39 = arith.muli %arg1, %c256_i32_20 : i32
    %c128_i32 = arith.constant 128 : i32
    %40 = arith.addi %39, %c128_i32 : i32
    %41 = tpu.iota {dimensions = array<i32: 1>} : vector<1x128xi32>
    %42 = vector.broadcast %40 : i32 to vector<1x128xi32>
    %43 = arith.addi %42, %41 : vector<1x128xi32>
    %c384_i32_21 = arith.constant 384 : i32
    %44 = vector.broadcast %c384_i32_21 : i32 to vector<1x128xi32>
    %45 = arith.cmpi slt, %43, %44 : vector<1x128xi32>
    %cst_22 = arith.constant -1.000000e+30 : f32
    %46 = vector.shape_cast %45 : vector<1x128xi1> to vector<1x128xi1>
    %47 = vector.broadcast %46 : vector<1x128xi1> to vector<16x128xi1>
    %48 = vector.broadcast %cst_22 : f32 to vector<16x128xf32>
    %49 = arith.select %47, %38, %48 : vector<16x128xi1>, vector<16x128xf32>
    %c0_23 = arith.constant 0 : index
    %c0_24 = arith.constant 0 : index
    %50 = vector.load %arg6[%c0_23, %c0_24] : memref<16x1xf32, #tpu.memory_space<vmem>>, vector<16x1xf32>
    %cst_25 = arith.constant dense<0xFF800000> : vector<16xf32>
    %51 = vector.multi_reduction <maximumf>, %49, %cst_25 [1] : vector<16x128xf32> to vector<16xf32>
    %52 = vector.shape_cast %51 : vector<16xf32> to vector<16x1xf32>
    %53 = arith.maximumf %50, %52 : vector<16x1xf32>
    %54 = arith.subf %50, %53 : vector<16x1xf32>
    %55 = math.exp %54 : vector<16x1xf32>
    %c0_26 = arith.constant 0 : index
    %c0_27 = arith.constant 0 : index
    %56 = vector.load %arg7[%c0_26, %c0_27] : memref<16x1xf32, #tpu.memory_space<vmem>>, vector<16x1xf32>
    %57 = arith.mulf %55, %56 : vector<16x1xf32>
    %58 = vector.broadcast %53 : vector<16x1xf32> to vector<16x128xf32>
    %59 = arith.subf %49, %58 : vector<16x128xf32>
    %60 = math.exp %59 : vector<16x128xf32>
    %cst_28 = arith.constant dense<0.000000e+00> : vector<16xf32>
    %61 = vector.multi_reduction <add>, %60, %cst_28 [1] : vector<16x128xf32> to vector<16xf32>
    %62 = vector.shape_cast %61 : vector<16xf32> to vector<16x1xf32>
    %63 = arith.addf %57, %62 : vector<16x1xf32>
    %c0_29 = arith.constant 0 : index
    %c0_30 = arith.constant 0 : index
    %64 = vector.load %arg7[%c0_29, %c0_30] : memref<16x1xf32, #tpu.memory_space<vmem>>, vector<16x1xf32>
    tpu.vector_store %arg7[%c0_29, %c0_30], %63 {strides = array<i32>} : memref<16x1xf32, #tpu.memory_space<vmem>>, vector<16x1xf32>,
    %c0_31 = arith.constant 0 : index
    %c0_32 = arith.constant 0 : index
    %65 = vector.load %arg6[%c0_31, %c0_32] : memref<16x1xf32, #tpu.memory_space<vmem>>, vector<16x1xf32>
    tpu.vector_store %arg6[%c0_31, %c0_32], %53 {strides = array<i32>} : memref<16x1xf32, #tpu.memory_space<vmem>>, vector<16x1xf32>,
    %c1_i32 = arith.constant 1 : i32
    %66 = arith.cmpi eq, %arg1, %c1_i32 : i32
    %67 = arith.extui %66 : i1 to i32
    %c0_i32_33 = arith.constant 0 : i32
    %68 = arith.cmpi ne, %67, %c0_i32_33 : i32
    scf.if %68 {
      %c0_34 = arith.constant 0 : index
      %c0_35 = arith.constant 0 : index
      %69 = vector.load %arg6[%c0_34, %c0_35] : memref<16x1xf32, #tpu.memory_space<vmem>>, vector<16x1xf32>
      %c0_36 = arith.constant 0 : index
      %c0_37 = arith.constant 0 : index
      %70 = vector.load %arg7[%c0_36, %c0_37] : memref<16x1xf32, #tpu.memory_space<vmem>>, vector<16x1xf32>
      %71 = math.log %70 : vector<16x1xf32>
      %72 = arith.addf %69, %71 : vector<16x1xf32>
      %c0_38 = arith.constant 0 : index
      %c0_39 = arith.constant 0 : index
      %73 = vector.load %arg2[%c0_38, %c0_39] : memref<16x1xf32, #tpu.memory_space<vmem>>, vector<16x1xf32>
      %74 = arith.subf %72, %73 : vector<16x1xf32>
      %c0_40 = arith.constant 0 : index
      %c0_41 = arith.constant 0 : index
      %75 = vector.load %arg5[%c0_40, %c0_41] : memref<16x1xf32, #tpu.memory_space<vmem>>, vector<16x1xf32>
      tpu.vector_store %arg5[%c0_40, %c0_41], %74 {strides = array<i32>} : memref<16x1xf32, #tpu.memory_space<vmem>>, vector<16x1xf32>,
    } else {
    }
    return
  }
  func.func @transform_0(%arg0: i32, %arg1: i32) -> (i32, i32) {
    %c0_i32 = arith.constant 0 : i32
    %c0_i32_0 = arith.constant 0 : i32
    return %arg0, %c0_i32 : i32, i32
  }
  func.func @transform_1(%arg0: i32, %arg1: i32) -> (i32, i32) {
    %c0_i32 = arith.constant 0 : i32
    %c0_i32_0 = arith.constant 0 : i32
    return %arg0, %c0_i32 : i32, i32
  }
  func.func @transform_2(%arg0: i32, %arg1: i32) -> (i32, i32) {
    %c0_i32 = arith.constant 0 : i32
    %c0_i32_0 = arith.constant 0 : i32
    return %arg1, %c0_i32 : i32, i32
  }
  func.func @transform_3(%arg0: i32, %arg1: i32) -> (i32, i32) {
    %c0_i32 = arith.constant 0 : i32
    %c0_i32_0 = arith.constant 0 : i32
    return %arg0, %c0_i32 : i32, i32
  }
}

</mosaic_0001>

<llo_original>
// kernel: tpu_custom_call.1
$region0: #{tpu_custom_call.1}
  #allocation0 [shape = 'u32[]', space=smem, size = 0x4, offset = 0x4, fixed_abs, tag = 'smem constant byte address 0x4 - core index']
  #allocation1 [shape = 'u32[72,128]{1,0:T(1,128)}', space=vmem, size = 0x9000, scoped, tag = 'internal scratch']
  #allocation2 [shape = 'f32[16,1]{1,0:T(8,128)}', space=vmem, size = 0x2000, scoped, tag = 'scratch operand']
  #allocation3 [shape = 'f32[16,1]{1,0:T(8,128)}', space=vmem, size = 0x2000, scoped, tag = 'scratch operand']
  %s0 = inlined_call_operand.vmem [shape: f32[16,1], index: 0, kind: input, shape index: {}]
  %s1 = inlined_call_operand.vmem [shape: f32[16,64], index: 1, kind: input, shape index: {}]
  %s2 = inlined_call_operand.vmem [shape: f32[512,64], index: 2, kind: input, shape index: {}]
  %s3 = inlined_call_operand.vmem [shape: f32[16,1], index: 3, kind: output, shape index: {}]
  %s4 = sld [smem:[#allocation0]]
  $region53: #{tpu_custom_call.1} parent=0
    _
  %s6 = ssub.s32 1, %s4
  %s7 = scalar_select 0, %s6, %s4
  loop: start=0, step=1, limit=4
  $region2: #{tpu_custom_call.1} parent=0 // loop_pre_header
    _
  $region3: #{tpu_custom_call.1} parent=0 // loop_header
    %s9 = sphi 0, %s13
    %p10 = scmp.ge.s32.totalorder %s9, 4
    %s16 = sphi 0, %s28
    %s17 = sphi 0, %s24
    %s18 = sphi 0, %s16
    %s19 = sphi 0, %s17
    %s20 = sphi 0, %s18
    %s21 = sphi 0, %s19
    %s31 = sphi 0, %s33
    %s34 = sphi 0, %s31
    %s35 = sphi 0, %s34
    %s51 = sphi 0, %s35
    %s57 = sphi 0, %s59
    %s60 = sphi 0, %s57
    %s61 = sphi 0, %s60
    %s77 = sphi 0, %s61
    %s83 = sphi 0, %s85
    %s86 = sphi 0, %s83
    %s87 = sphi 0, %s86
    %s103 = sphi 0, %s87
    %s109 = sphi 0, %s111
    %s112 = sphi 0, %s109
    %s113 = sphi 0, %s112
    %s129 = sphi 0, %s113
  $region4: #{tpu_custom_call.1} parent=0 // loop_header_branch
    %12 = sbr.rel (%p10) target = $region8
  $region5: #{tpu_custom_call.1} parent=0 // loop_body
    %s14 = ssub.s32 %s9, 1
    %s15 = ssub.s32 %s9, 2
    %s22 = sadd.s32 1, %s17
    %p23 = scmp.ge.s32.totalorder %s22, 2
    %s24 = scalar_select %p23, 0, %s22
    %s25 = sadd.s32 1, %s16
    %s26 = scalar_select %p23, %s25, %s16
    %p27 = scmp.ge.s32.totalorder %s26, 1
    %s28 = scalar_select %p27, 0, %s26
    %s29 = ssub.s32 %s16, %s28
    %p30 = scmp.eq.s32.totalorder %s29, 0
    %s32 = sadd.s32 %s31, 1
    %s33 = scalar_select %p30, %s31, %s32
    %p36 = pneg %p30
    %p37 = scmp.eq.s32.totalorder %s9, 1
    %p38 = por %p36, %p37
    %p39 = scmp.ne.s32.totalorder %s31, %s34
    %p40 = scmp.eq.s32.totalorder %s9, 0
    %p41 = por %p39, %p40
    %p42 = scmp.ne.s32.totalorder %s31, %s34
    %p43 = scmp.eq.s32.totalorder %s14, 1
    %p44 = por %p42, %p43
    %p45 = scmp.ne.s32.totalorder %s34, %s35
    %p46 = scmp.eq.s32.totalorder %s14, 0
    %p47 = por %p45, %p46
    %p48 = scmp.ne.s32.totalorder %s34, %s35
    %p49 = scmp.eq.s32.totalorder %s15, 1
    %p50 = por %p48, %p49
    %p52 = scmp.ne.s32.totalorder %s35, %s51
    %p53 = scmp.eq.s32.totalorder %s15, 0
    %p54 = por %p52, %p53
    %s55 = ssub.s32 %s16, %s28
    %p56 = scmp.eq.s32.totalorder %s55, 0
    %s58 = sadd.s32 %s57, 1
    %s59 = scalar_select %p56, %s57, %s58
    %p62 = pneg %p56
    %p63 = scmp.eq.s32.totalorder %s9, 1
    %p64 = por %p62, %p63
    %p65 = scmp.ne.s32.totalorder %s57, %s60
    %p66 = scmp.eq.s32.totalorder %s9, 0
    %p67 = por %p65, %p66
    %p68 = scmp.ne.s32.totalorder %s57, %s60
    %p69 = scmp.eq.s32.totalorder %s14, 1
    %p70 = por %p68, %p69
    %p71 = scmp.ne.s32.totalorder %s60, %s61
    %p72 = scmp.eq.s32.totalorder %s14, 0
    %p73 = por %p71, %p72
    %p74 = scmp.ne.s32.totalorder %s60, %s61
    %p75 = scmp.eq.s32.totalorder %s15, 1
    %p76 = por %p74, %p75
    %p78 = scmp.ne.s32.totalorder %s61, %s77
    %p79 = scmp.eq.s32.totalorder %s15, 0
    %p80 = por %p78, %p79
    %s81 = ssub.s32 %s17, %s24
    %p82 = scmp.eq.s32.totalorder %s81, 0
    %s84 = sadd.s32 %s83, 1
    %s85 = scalar_select %p82, %s83, %s84
    %p88 = pneg %p82
    %p89 = scmp.eq.s32.totalorder %s9, 1
    %p90 = por %p88, %p89
    %p91 = scmp.ne.s32.totalorder %s83, %s86
    %p92 = scmp.eq.s32.totalorder %s9, 0
    %p93 = por %p91, %p92
    %p94 = scmp.ne.s32.totalorder %s83, %s86
    %p95 = scmp.eq.s32.totalorder %s14, 1
    %p96 = por %p94, %p95
    %p97 = scmp.ne.s32.totalorder %s86, %s87
    %p98 = scmp.eq.s32.totalorder %s14, 0
    %p99 = por %p97, %p98
    %p100 = scmp.ne.s32.totalorder %s86, %s87
    %p101 = scmp.eq.s32.totalorder %s15, 1
    %p102 = por %p100, %p101
    %p104 = scmp.ne.s32.totalorder %s87, %s103
    %p105 = scmp.eq.s32.totalorder %s15, 0
    %p106 = por %p104, %p105
    %s107 = ssub.s32 %s16, %s28
    %p108 = scmp.eq.s32.totalorder %s107, 0
    %s110 = sadd.s32 %s109, 1
    %s111 = scalar_select %p108, %s109, %s110
    %p114 = pneg %p108
    %p115 = scmp.eq.s32.totalorder %s9, 1
    %p116 = por %p114, %p115
    %p117 = scmp.ne.s32.totalorder %s109, %s112
    %p118 = scmp.eq.s32.totalorder %s9, 0
    %p119 = por %p117, %p118
    %p120 = scmp.ne.s32.totalorder %s109, %s112
    %p121 = scmp.eq.s32.totalorder %s14, 1
    %p122 = por %p120, %p121
    %p123 = scmp.ne.s32.totalorder %s112, %s113
    %p124 = scmp.eq.s32.totalorder %s14, 0
    %p125 = por %p123, %p124
    %p126 = scmp.ne.s32.totalorder %s112, %s113
    %p127 = scmp.eq.s32.totalorder %s15, 1
    %p128 = por %p126, %p127
    %p130 = scmp.ne.s32.totalorder %s113, %s129
    %p131 = scmp.eq.s32.totalorder %s15, 0
    %p132 = por %p130, %p131
    %p133 = scmp.le.s32.totalorder 1, %s9
    %p134 = scmp.lt.s32.totalorder %s9, 3
    %p135 = pnand %p133, %p134
    %p136 = pneg %p135
    // Predicated region
    $region9: #{tpu_custom_call.1} parent=5 // pred_check
      _
    $region10: #{tpu_custom_call.1} parent=5 // pred_check_branch
      %138 = sbr.rel (%p135) target = $region12
    $region11: #{tpu_custom_call.1} parent=5 // pred_region
      %s139 = ssub.s32 %s9, 1
      // Predicated region
      $region13: #{tpu_custom_call.1} parent=11 // pred_check
        %p140 = pneg %p47
      $region14: #{tpu_custom_call.1} parent=11 // pred_check_branch
        %142 = sbr.rel (%p140) target = $region16
      $region15: #{tpu_custom_call.1} parent=11 // pred_region
        %s143 = smul.u32 2, %s18
        %p144 = scmp.lt.s32.totalorder %s143, 1
        %s145 = scalar_select %p144, %s143, 1
        %s146 = smul.addr %s145, 8
        %s147 = scalar_lea.vmem %s0, %s146
        %s148 = smul.u32 2, %s18
      $region16: #{tpu_custom_call.1} parent=11 // pred_fallthru
        _
      // Predicated region
      $region17: #{tpu_custom_call.1} parent=11 // pred_check
        %p149 = pneg %p73
      $region18: #{tpu_custom_call.1} parent=11 // pred_check_branch
        %151 = sbr.rel (%p149) target = $region20
      $region19: #{tpu_custom_call.1} parent=11 // pred_region
        %s152 = smul.u32 2, %s18
        %p153 = scmp.lt.s32.totalorder %s152, 1
        %s154 = scalar_select %p153, %s152, 1
        %s155 = smul.addr %s154, 8
        %s156 = scalar_lea.vmem %s1, %s155
        %s157 = smul.u32 2, %s18
      $region20: #{tpu_custom_call.1} parent=11 // pred_fallthru
        _
    $region12: #{tpu_custom_call.1} parent=5 // pred_fallthru
      _
    %p158 = scmp.lt.s32.totalorder %s9, 2
    // Predicated region
    $region21: #{tpu_custom_call.1} parent=5 // pred_check
      %p159 = pneg %p158
    $region22: #{tpu_custom_call.1} parent=5 // pred_check_branch
      %161 = sbr.rel (%p159) target = $region24
    $region23: #{tpu_custom_call.1} parent=5 // pred_region
      // Predicated region
      $region25: #{tpu_custom_call.1} parent=23 // pred_check
        %p162 = pneg %p93
      $region26: #{tpu_custom_call.1} parent=23 // pred_check_branch
        %164 = sbr.rel (%p162) target = $region28
      $region27: #{tpu_custom_call.1} parent=23 // pred_region
        %s165 = smul.u32 32, %s17
        %p166 = scmp.lt.s32.totalorder %s165, 63
        %s167 = scalar_select %p166, %s165, 63
        %s168 = smul.addr %s167, 8
        %s169 = scalar_lea.vmem %s2, %s168
        %s170 = smul.u32 32, %s17
      $region28: #{tpu_custom_call.1} parent=23 // pred_fallthru
        _
    $region24: #{tpu_custom_call.1} parent=5 // pred_fallthru
      _
    %p171 = scmp.le.s32.totalorder 1, %s9
    %p172 = scmp.lt.s32.totalorder %s9, 3
    %p173 = pnand %p171, %p172
    %p174 = pneg %p173
    // Predicated region
    $region29: #{tpu_custom_call.1} parent=5 // pred_check
      _
    $region30: #{tpu_custom_call.1} parent=5 // pred_check_branch
      %176 = sbr.rel (%p173) target = $region32
    $region31: #{tpu_custom_call.1} parent=5 // pred_region
      %s177 = ssub.s32 %s9, 1
      %s178 = smul.u32 2, %s18
      %p179 = scmp.lt.s32.totalorder %s178, 1
      %s180 = scalar_select %p179, %s178, 1
      %s181 = smul.addr %s180, 8
      %s182 = scalar_lea.vmem %s0, %s181
      %p183 = pneg %p47
      %p184 = pneg %p44
      %s185 = smul.u32 2, %s18
      %p186 = scmp.lt.s32.totalorder %s185, 1
      %s187 = scalar_select %p186, %s185, 1
      %s188 = smul.addr %s187, 8
      %s189 = scalar_lea.vmem %s1, %s188
      %p190 = pneg %p73
      %p191 = pneg %p70
      %s192 = smul.u32 32, %s19
      %p193 = scmp.lt.s32.totalorder %s192, 63
      %s194 = scalar_select %p193, %s192, 63
      %s195 = smul.addr %s194, 8
      %s196 = scalar_lea.vmem %s2, %s195
      %p197 = pneg %p99
      %p198 = pneg %p96
      %p199 = pneg %p125
      %p200 = pneg %p122
      %s201 = smul.u32 2, %s18
      %p202 = scmp.lt.s32.totalorder %s201, 1
      %s203 = scalar_select %p202, %s201, 1
      %s204 = smul.addr %s203, 8
      %s205 = scalar_lea.vmem %s3, %s204
      %s206 = smul.u32 2, %s18
      %p207 = scmp.lt.s32.totalorder %s206, 1
      %s208 = scalar_select %p207, %s206, 1
      %s209 = smul.addr %s208, 8
      %s210 = scalar_lea.vmem %s0, %s209
      %s211 = smul.u32 2, %s18
      %s212 = smul.u32 2, %s18
      %p213 = scmp.lt.s32.totalorder %s212, 1
      %s214 = scalar_select %p213, %s212, 1
      %s215 = smul.addr %s214, 8
      %s216 = scalar_lea.vmem %s1, %s215
      %s217 = smul.u32 2, %s18
      %s218 = smul.u32 32, %s19
      %p219 = scmp.lt.s32.totalorder %s218, 63
      %s220 = scalar_select %p219, %s218, 63
      %s221 = smul.addr %s220, 8
      %s222 = scalar_lea.vmem %s2, %s221
      %s223 = smul.u32 32, %s19
      %s224 = smul.u32 2, %s18
      %p225 = scmp.lt.s32.totalorder %s224, 1
      %s226 = scalar_select %p225, %s224, 1
      %s227 = smul.addr %s226, 8
      %s228 = scalar_lea.vmem %s3, %s227
      %s229 = smul.u32 2, %s18
      %p230 = scmp.eq.s32.totalorder %s19, 0
      // Predicated region
      $region33: #{tpu_custom_call.1} parent=31 // pred_check
        %p231 = pneg %p230
      $region34: #{tpu_custom_call.1} parent=31 // pred_check_branch
        %233 = sbr.rel (%p231) target = $region36
      $region35: #{tpu_custom_call.1} parent=31 // pred_region
        %v234 = vld [vmem:[%s210] sm:$0xff]
        %v235 = vld [vmem:[%s210 + $0x8] sm:$0xff]
        %vm236 = vcmask 7168
        %237 = vst.msk [vmem:[#allocation2] sm:$0xff] %vm236, %v234
        %238 = vst.msk [vmem:[#allocation2 + $0x8] sm:$0xff] %vm236, %v235
        %239 = vst.msk [vmem:[#allocation3] sm:$0xff] %vm236, 1.0
        %240 = vst.msk [vmem:[#allocation3 + $0x8] sm:$0xff] %vm236, 1.0
      $region36: #{tpu_custom_call.1} parent=31 // pred_fallthru
        _
      %v241 = vld [vmem:[%s216] sm:$0xff]
      %v242 = vld [vmem:[%s216 + $0x8] sm:$0xff]
      %v243 = vld [vmem:[%s222] sm:$0xff]
      %v244 = vld [vmem:[%s222 + $0x8] sm:$0xff]
      %v245 = vld [vmem:[%s222 + $0x10] sm:$0xff]
      %v246 = vld [vmem:[%s222 + $0x18] sm:$0xff]
      %v247 = vld [vmem:[%s222 + $0x20] sm:$0xff]
      %v248 = vld [vmem:[%s222 + $0x28] sm:$0xff]
      %v249 = vld [vmem:[%s222 + $0x30] sm:$0xff]
      %v250 = vld [vmem:[%s222 + $0x38] sm:$0xff]
      %v251 = vld [vmem:[%s222 + $0x40] sm:$0xff]
      %v252 = vld [vmem:[%s222 + $0x48] sm:$0xff]
      %v253 = vld [vmem:[%s222 + $0x50] sm:$0xff]
      %v254 = vld [vmem:[%s222 + $0x58] sm:$0xff]
      %v255 = vld [vmem:[%s222 + $0x60] sm:$0xff]
      %v256 = vld [vmem:[%s222 + $0x68] sm:$0xff]
      %v257 = vld [vmem:[%s222 + $0x70] sm:$0xff]
      %v258 = vld [vmem:[%s222 + $0x78] sm:$0xff]
      %vm259 = vcmask 523264
      %v261 = vsel %vm259, %v241, 0
      %v264 = vsel %vm259, %v242, 0
      %v267 = vsel %vm259, %v243, 0
      %v270 = vsel %vm259, %v244, 0
      %v273 = vsel %vm259, %v245, 0
      %v276 = vsel %vm259, %v246, 0
      %v279 = vsel %vm259, %v247, 0
      %v282 = vsel %vm259, %v248, 0
      %v285 = vsel %vm259, %v249, 0
      %v288 = vsel %vm259, %v250, 0
      %v291 = vsel %vm259, %v251, 0
      %v294 = vsel %vm259, %v252, 0
      %v297 = vsel %vm259, %v253, 0
      %v300 = vsel %vm259, %v254, 0
      %v303 = vsel %vm259, %v255, 0
      %v306 = vsel %vm259, %v256, 0
      %v309 = vsel %vm259, %v257, 0
      %v312 = vsel %vm259, %v258, 0
      %314 = vmatpush.xpose.msra.mxu0 %v312
      %315 = vmatpush.xpose.msra.mxu0 %v309
      %316 = vmatpush.xpose.msra.mxu0 %v306
      %317 = vmatpush.xpose.msra.mxu0 %v303
      %318 = vmatpush.xpose.msra.mxu0 %v300
      %319 = vmatpush.xpose.msra.mxu0 %v297
      %320 = vmatpush.xpose.msra.mxu0 %v294
      %321 = vmatpush.xpose.msra.mxu0 %v291
      %322 = vmatpush.xpose.msra.mxu0 %v288
      %323 = vmatpush.xpose.msra.mxu0 %v285
      %324 = vmatpush.xpose.msra.mxu0 %v282
      %325 = vmatpush.xpose.msra.mxu0 %v279
      %326 = vmatpush.xpose.msra.mxu0 %v276
      %327 = vmatpush.xpose.msra.mxu0 %v273
      %328 = vmatpush.xpose.msra.mxu0 %v270
      %329 = vmatpush.xpose.msra.mxu0 %v267
      %330 = vmatmul.f32.gmra.mxu0 %v261
      %v331 = vpop.f32.mrf.mxu0
      %v332 = vadd.f32 0.0, %v331
      %333 = vmatmul.f32.gmra.mxu0 %v264
      %v334 = vpop.f32.mrf.mxu0
      %v335 = vadd.f32 0.0, %v334
      %336 = vdwg.mxu0
      %v337 = vmul.f32 %v332, 14.285714
      %v338 = vmul.f32 %v335, 14.285714
      %s339 = smul.u32 %s19, 256
      %v340 = vlaneseq
      %v341 = vand.u32 %v340, 127
      %v342 = vstv %s339
      %v343 = vadd.s32 %v342, %v341
      %vm344 = vcmp.lt.s32.totalorder %v343, 384
      %v345 = vsel %vm344, 1, 0
      %vm346 = vcmp.eq.s32.totalorder %v345, 1
      %v347 = vsel %vm346, %v337, -1e+30
      %v348 = vsel %vm346, %v338, -1e+30
      %v349 = vld [vmem:[#allocation2] sm:$0xff]
      %v350 = vld [vmem:[#allocation2 + $0x8] sm:$0xff]
      %351 = vmax.xlane.f32.xlu0 %v347
      %v352 = vpop.xlane.xlu0 %351
      %353 = vmax.xlane.f32.xlu0 %v348
      %v354 = vpop.xlane.xlu0 %353
      %v355 = vmax.f32 %v349, %v352
      %v356 = vmax.f32 %v350, %v354
      %v357 = vsub.f32 %v349, %v355
      %v358 = vsub.f32 %v350, %v356
      %v359 = vmul.f32 %v357, 1.442695
      %v360 = vpow.pop %v359
      %v361 = vmul.f32 %v358, 1.442695
      %v362 = vpow.pop %v361
      %v363 = vld [vmem:[#allocation3] sm:$0xff]
      %v364 = vld [vmem:[#allocation3 + $0x8] sm:$0xff]
      %v365 = vmul.f32 %v360, %v363
      %v366 = vmul.f32 %v362, %v364
      %368 = vset.pattern.permute.xlu0 0
      %369 = vperm.xlu0 %368, %v355
      %v370 = vpop.permute.xlu0 %369
      %373 = vset.pattern.permute.xlu0 0
      %374 = vperm.xlu0 %373, %v356
      %v375 = vpop.permute.xlu0 %374
      %v377 = vsub.f32 %v347, %v370
      %v378 = vsub.f32 %v348, %v375
      %v379 = vmul.f32 %v377, 1.442695
      %v380 = vpow.pop %v379
      %v381 = vmul.f32 %v378, 1.442695
      %v382 = vpow.pop %v381
      %383 = vadd.xlane.f32.xlu0 %v380
      %v384 = vpop.xlane.xlu0 %383
      %385 = vadd.xlane.f32.xlu0 %v382
      %v386 = vpop.xlane.xlu0 %385
      %v387 = vadd.f32 %v365, %v384
      %v388 = vadd.f32 %v366, %v386
      %vm389 = vcmask 7168
      %390 = vst.msk [vmem:[#allocation3] sm:$0xff] %vm389, %v387
      %391 = vst.msk [vmem:[#allocation3 + $0x8] sm:$0xff] %vm389, %v388
      %392 = vst.msk [vmem:[#allocation2] sm:$0xff] %vm389, %v355
      %393 = vst.msk [vmem:[#allocation2 + $0x8] sm:$0xff] %vm389, %v356
      %v394 = vld [vmem:[%s222 + $0x80] sm:$0xff]
      %v395 = vld [vmem:[%s222 + $0x88] sm:$0xff]
      %v396 = vld [vmem:[%s222 + $0x90] sm:$0xff]
      %v397 = vld [vmem:[%s222 + $0x98] sm:$0xff]
      %v398 = vld [vmem:[%s222 + $0xa0] sm:$0xff]
      %v399 = vld [vmem:[%s222 + $0xa8] sm:$0xff]
      %v400 = vld [vmem:[%s222 + $0xb0] sm:$0xff]
      %v401 = vld [vmem:[%s222 + $0xb8] sm:$0xff]
      %v402 = vld [vmem:[%s222 + $0xc0] sm:$0xff]
      %v403 = vld [vmem:[%s222 + $0xc8] sm:$0xff]
      %v404 = vld [vmem:[%s222 + $0xd0] sm:$0xff]
      %v405 = vld [vmem:[%s222 + $0xd8] sm:$0xff]
      %v406 = vld [vmem:[%s222 + $0xe0] sm:$0xff]
      %v407 = vld [vmem:[%s222 + $0xe8] sm:$0xff]
      %v408 = vld [vmem:[%s222 + $0xf0] sm:$0xff]
      %v409 = vld [vmem:[%s222 + $0xf8] sm:$0xff]
      %v411 = vsel %vm259, %v394, 0
      %v414 = vsel %vm259, %v395, 0
      %v417 = vsel %vm259, %v396, 0
      %v420 = vsel %vm259, %v397, 0
      %v423 = vsel %vm259, %v398, 0
      %v426 = vsel %vm259, %v399, 0
      %v429 = vsel %vm259, %v400, 0
      %v432 = vsel %vm259, %v401, 0
      %v435 = vsel %vm259, %v402, 0
      %v438 = vsel %vm259, %v403, 0
      %v441 = vsel %vm259, %v404, 0
      %v444 = vsel %vm259, %v405, 0
      %v447 = vsel %vm259, %v406, 0
      %v450 = vsel %vm259, %v407, 0
      %v453 = vsel %vm259, %v408, 0
      %v456 = vsel %vm259, %v409, 0
      %458 = vmatpush.xpose.msra.mxu0 %v456
      %459 = vmatpush.xpose.msra.mxu0 %v453
      %460 = vmatpush.xpose.msra.mxu0 %v450
      %461 = vmatpush.xpose.msra.mxu0 %v447
      %462 = vmatpush.xpose.msra.mxu0 %v444
      %463 = vmatpush.xpose.msra.mxu0 %v441
      %464 = vmatpush.xpose.msra.mxu0 %v438
      %465 = vmatpush.xpose.msra.mxu0 %v435
      %466 = vmatpush.xpose.msra.mxu0 %v432
      %467 = vmatpush.xpose.msra.mxu0 %v429
      %468 = vmatpush.xpose.msra.mxu0 %v426
      %469 = vmatpush.xpose.msra.mxu0 %v423
      %470 = vmatpush.xpose.msra.mxu0 %v420
      %471 = vmatpush.xpose.msra.mxu0 %v417
      %472 = vmatpush.xpose.msra.mxu0 %v414
      %473 = vmatpush.xpose.msra.mxu0 %v411
      %474 = vmatmul.f32.gmra.mxu0 %v261
      %v475 = vpop.f32.mrf.mxu0
      %v476 = vadd.f32 0.0, %v475
      %477 = vmatmul.f32.gmra.mxu0 %v264
      %v478 = vpop.f32.mrf.mxu0
      %v479 = vadd.f32 0.0, %v478
      %480 = vdwg.mxu0
      %v481 = vmul.f32 %v476, 14.285714
      %v482 = vmul.f32 %v479, 14.285714
      %s483 = sadd.s32 %s339, 128
      %v484 = vstv %s483
      %v485 = vadd.s32 %v484, %v341
      %vm486 = vcmp.lt.s32.totalorder %v485, 384
      %v487 = vsel %vm486, 1, 0
      %vm488 = vcmp.eq.s32.totalorder %v487, 1
      %v489 = vsel %vm488, %v481, -1e+30
      %v490 = vsel %vm488, %v482, -1e+30
      %v491 = vld [vmem:[#allocation2] sm:$0xff]
      %v492 = vld [vmem:[#allocation2 + $0x8] sm:$0xff]
      %493 = vmax.xlane.f32.xlu0 %v489
      %v494 = vpop.xlane.xlu0 %493
      %495 = vmax.xlane.f32.xlu0 %v490
      %v496 = vpop.xlane.xlu0 %495
      %v497 = vmax.f32 %v491, %v494
      %v498 = vmax.f32 %v492, %v496
      %v499 = vsub.f32 %v491, %v497
      %v500 = vsub.f32 %v492, %v498
      %v501 = vmul.f32 %v499, 1.442695
      %v502 = vpow.pop %v501
      %v503 = vmul.f32 %v500, 1.442695
      %v504 = vpow.pop %v503
      %v505 = vld [vmem:[#allocation3] sm:$0xff]
      %v506 = vld [vmem:[#allocation3 + $0x8] sm:$0xff]
      %v507 = vmul.f32 %v502, %v505
      %v508 = vmul.f32 %v504, %v506
      %510 = vset.pattern.permute.xlu0 0
      %511 = vperm.xlu0 %510, %v497
      %v512 = vpop.permute.xlu0 %511
      %515 = vset.pattern.permute.xlu0 0
      %516 = vperm.xlu0 %515, %v498
      %v517 = vpop.permute.xlu0 %516
      %v519 = vsub.f32 %v489, %v512
      %v520 = vsub.f32 %v490, %v517
      %v521 = vmul.f32 %v519, 1.442695
      %v522 = vpow.pop %v521
      %v523 = vmul.f32 %v520, 1.442695
      %v524 = vpow.pop %v523
      %525 = vadd.xlane.f32.xlu0 %v522
      %v526 = vpop.xlane.xlu0 %525
      %527 = vadd.xlane.f32.xlu0 %v524
      %v528 = vpop.xlane.xlu0 %527
      %v529 = vadd.f32 %v507, %v526
      %v530 = vadd.f32 %v508, %v528
      %531 = vst.msk [vmem:[#allocation3] sm:$0xff] %vm389, %v529
      %532 = vst.msk [vmem:[#allocation3 + $0x8] sm:$0xff] %vm389, %v530
      %533 = vst.msk [vmem:[#allocation2] sm:$0xff] %vm389, %v497
      %534 = vst.msk [vmem:[#allocation2 + $0x8] sm:$0xff] %vm389, %v498
      %p535 = scmp.eq.s32.totalorder %s19, 1
      // Predicated region
      $region37: #{tpu_custom_call.1} parent=31 // pred_check
        %p536 = pneg %p535
      $region38: #{tpu_custom_call.1} parent=31 // pred_check_branch
        %538 = sbr.rel (%p536) target = $region40
      $region39: #{tpu_custom_call.1} parent=31 // pred_region
        %v539 = vld [vmem:[#allocation2] sm:$0xff]
        %v540 = vld [vmem:[#allocation2 + $0x8] sm:$0xff]
        %v541 = vld [vmem:[#allocation3] sm:$0xff]
        %v542 = vld [vmem:[#allocation3 + $0x8] sm:$0xff]
        %v543 = vlog2.pop %v541
        %v544 = vmul.f32 %v543, 0.6931472
        %v545 = vlog2.pop %v542
        %v546 = vmul.f32 %v545, 0.6931472
        %v547 = vadd.f32 %v539, %v544
        %v548 = vadd.f32 %v540, %v546
        %v549 = vld [vmem:[%s210] sm:$0xff]
        %v550 = vld [vmem:[%s210 + $0x8] sm:$0xff]
        %v551 = vsub.f32 %v547, %v549
        %v552 = vsub.f32 %v548, %v550
        %553 = vst.msk [vmem:[%s228] sm:$0xff] %vm389, %v551
        %554 = vst.msk [vmem:[%s228 + $0x8] sm:$0xff] %vm389, %v552
      $region40: #{tpu_custom_call.1} parent=31 // pred_fallthru
        _
      %s555 = smul.u32 2, %s18
      %p556 = scmp.lt.s32.totalorder %s555, 1
      %s557 = scalar_select %p556, %s555, 1
      %s558 = smul.addr %s557, 8
      %s559 = scalar_lea.vmem %s3, %s558
      // Predicated region
      $region41: #{tpu_custom_call.1} parent=31 // pred_check
        %p560 = pneg %p122
      $region42: #{tpu_custom_call.1} parent=31 // pred_check_branch
        %562 = sbr.rel (%p560) target = $region44
      $region43: #{tpu_custom_call.1} parent=31 // pred_region
        %s563 = smul.u32 2, %s18
      $region44: #{tpu_custom_call.1} parent=31 // pred_fallthru
        _
      // Predicated region
      $region45: #{tpu_custom_call.1} parent=31 // pred_check
        %p564 = pneg %p122
      $region46: #{tpu_custom_call.1} parent=31 // pred_check_branch
        %566 = sbr.rel (%p564) target = $region48
      $region47: #{tpu_custom_call.1} parent=31 // pred_region
        %s567 = smul.u32 2, %s18
        %p568 = scmp.lt.s32.totalorder %s567, 1
        %s569 = scalar_select %p568, %s567, 1
        %s570 = smul.addr %s569, 8
        %s571 = scalar_lea.vmem %s3, %s570
      $region48: #{tpu_custom_call.1} parent=31 // pred_fallthru
        _
    $region32: #{tpu_custom_call.1} parent=5 // pred_fallthru
      _
    %p572 = scmp.le.s32.totalorder 2, %s9
    // Predicated region
    $region49: #{tpu_custom_call.1} parent=5 // pred_check
      %p573 = pneg %p572
    $region50: #{tpu_custom_call.1} parent=5 // pred_check_branch
      %575 = sbr.rel (%p573) target = $region52
    $region51: #{tpu_custom_call.1} parent=5 // pred_region
      %s576 = ssub.s32 %s9, 2
    $region52: #{tpu_custom_call.1} parent=5 // pred_fallthru
      _
  $region6: #{tpu_custom_call.1} parent=0 // loop_footer
    %s13 = sadd.s32 1, %s9
  $region7: #{tpu_custom_call.1} parent=0 // loop_footer_branch
    %8 = sbr.rel target = $region3
  $region8: #{tpu_custom_call.1} parent=0 // loop_exit
    _

</llo_original>
